<compile_context>
chip_gen: v5e
topology: v5e:2x2
jax: 0.10.0
libtpu: 0.0.40
codegen_flags: <defaults>
</compile_context>

<pallas_src>
import functools

import jax
import jax.numpy as jnp
from jax.experimental import pallas as pl
from jax.experimental.pallas import tpu as pltpu


def _music_lstm_kernel(x2d_ref, wxbig_ref, bbig_ref, wbig_ref, wfc_ref, bfc_ref,
                       out_ref, xg_ref, *, T, B, H):
    """Full 2-layer LSTM recurrence (wavefront-fused) + final Linear in one invocation.

    Joint gate-column layout (each block H wide): [i0, i1, f0, f1, o0, o1, g0, g1]
    Joint state layout (each half H wide):        h_cat = [h0 | h1], c_cat = [c0 | c1]
    """
    mm_dtype = x2d_ref.dtype                      # bf16 matmul operands; math in f32
    H2, H4, H6 = 2 * H, 4 * H, 6 * H

    # ---- Hoisted input projection (+ all biases): off the recurrent critical path.
    # Row block t: layer-0 gate columns = x_t @ W_ih0 + b0, layer-1 gate columns = b1.
    # (T+1 row blocks; the extra zero timestep keeps the unrolled wavefront loop uniform.)
    xg_ref[...] = (jnp.dot(x2d_ref[...], wxbig_ref[...],
                           preferred_element_type=jnp.float32)
                   + bbig_ref[...])

    wbig = wbig_ref[...]                          # (2H, 8H) bf16, loop-invariant resident

    def joint_activate(g_cat, c_cat):
        # One sigmoid over the i/f/o blocks of BOTH layers, one tanh over both g blocks.
        sig = jax.nn.sigmoid(g_cat[:, :H6])       # [i0,i1,f0,f1,o0,o1]
        gg = jnp.tanh(g_cat[:, H6:])              # [g0,g1]
        i_c = sig[:, 0:H2]
        f_c = sig[:, H2:H4]
        o_c = sig[:, H4:H6]
        c_new = f_c * c_cat + i_c * gg            # [c0'|c1']
        h_new = o_c * jnp.tanh(c_new)             # [h0'|h1']
        return h_new, c_new

    # ---- Prologue (wavefront step -1): h0_{-1} = h1_{-1} = 0, so the recurrent matmul is zero.
    # Joint-activate on xg row block 0 gives the correct (h0_0, c0_0) in the layer-0 half;
    # the layer-1 half is masked back to zero (it must still be the initial state).
    c_cat = jnp.zeros((B, H2), jnp.float32)
    h_cat, c_cat = joint_activate(xg_ref[0:B, :], c_cat)
    keep_l0 = jax.lax.broadcasted_iota(jnp.int32, (B, H2), 1) < H
    h_cat = jnp.where(keep_l0, h_cat, 0.0)
    c_cat = jnp.where(keep_l0, c_cat, 0.0)

    # ---- Wavefront recurrence: exactly ONE fused MXU issue per timestep on the serial chain.
    # step t:  [h0_t, h1_{t-1}] @ W_big  ->  layer-0 gates for t+1  |  layer-1 gates for t,
    # then one joint activation updates both layers at once (no concatenate, no extra cast).
    for t in range(T):
        g_cat = (jnp.dot(h_cat.astype(mm_dtype), wbig,
                         preferred_element_type=jnp.float32)
                 + xg_ref[(t + 1) * B:(t + 2) * B, :])
        h_cat, c_cat = joint_activate(g_cat, c_cat)

    # fc(out[:, -1, :]) on the layer-2 hidden state of the last timestep: h_cat[:, H:2H] == h1_{T-1}.
    h_last = h_cat[:, H:H2].astype(mm_dtype)
    out_ref[...] = (jnp.dot(h_last, wfc_ref[...], preferred_element_type=jnp.float32)
                    + bfc_ref[...]).astype(out_ref.dtype)


def music_lstm_forward(x, packed, *, use_bf16_matmul=True):
    """x: (B, T, D) float32 -> (B, output_size) float32, using pre-packed kernel params."""
    B, T, D = x.shape
    H = packed["w_big"].shape[0] // 2
    O = packed["w_fc"].shape[1]

    # Pad batch to a full sublane tile (multiple of 8): sublane-aligned per-timestep slices of
    # the hoisted projection. Extra rows are sliced off at the end.
    B_pad = max(8, -(-B // 8) * 8)
    mm_dtype = jnp.bfloat16 if use_bf16_matmul else jnp.float32
    # For much longer sequences, prefer use_bf16_matmul=False (bf16 hidden-state rounding compounds).

    x_tm = jnp.transpose(x, (1, 0, 2)).astype(jnp.float32)          # (T, B, D) time-major
    # Pad batch, and append ONE zero timestep so the wavefront loop can read row block t+1 at t=T-1.
    x_tm = jnp.pad(x_tm, ((0, 1), (0, B_pad - B), (0, 0)))          # (T+1, B_pad, D)
    x2d = x_tm.reshape((T + 1) * B_pad, D).astype(mm_dtype)

    inputs = (
        x2d,                                      # ((T+1)*B_pad, D)   bf16
        packed["w_x_big"].astype(mm_dtype),       # (D, 8H)            bf16 (layer-1 blocks zero)
        packed["b_big"],                          # (1, 8H)            f32  (b0 & b1 interleaved)
        packed["w_big"].astype(mm_dtype),         # (2H, 8H)           bf16 (fused recurrent weight)
        packed["w_fc"].astype(mm_dtype),          # (H, O)             bf16
        packed["b_fc"],                           # (1, O)             f32
    )

    vmem = pl.BlockSpec(memory_space=pltpu.MemorySpace.VMEM)
    out = pl.pallas_call(
        functools.partial(_music_lstm_kernel, T=T, B=B_pad, H=H),
        out_shape=jax.ShapeDtypeStruct((B_pad, O), jnp.float32),
        in_specs=[vmem] * len(inputs),
        out_specs=vmem,
        scratch_shapes=[pltpu.VMEM(((T + 1) * B_pad, 8 * H), jnp.float32)],  # hoisted projection
    )(*inputs)
    return out[:B]


def init_params(key, input_size, hidden_size, output_size):
    """PyTorch-layout parameters (gate row blocks in (i, f, g, o) order), U(-1/sqrt(H), 1/sqrt(H))."""
    H = hidden_size
    k = 1.0 / jnp.sqrt(jnp.float32(H))
    keys = jax.random.split(key, 10)

    def u(kk, shape):
        return jax.random.uniform(kk, shape, jnp.float32, -k, k)

    return {
        "w_ih_l0": u(keys[0], (4 * H, input_size)),
        "w_hh_l0": u(keys[1], (4 * H, H)),
        "b_ih_l0": u(keys[2], (4 * H,)),
        "b_hh_l0": u(keys[3], (4 * H,)),
        "w_ih_l1": u(keys[4], (4 * H, H)),
        "w_hh_l1": u(keys[5], (4 * H, H)),
        "b_ih_l1": u(keys[6], (4 * H,)),
        "b_hh_l1": u(keys[7], (4 * H,)),
        "w_fc":    u(keys[8], (output_size, H)),
        "b_fc":    u(keys[9], (output_size,)),
    }


def pack_params(p):
    """One-time (init-time) weight fusion / gate-column permutation for the kernel.

    Joint gate-column layout (each block H wide): [i0, i1, f0, f1, o0, o1, g0, g1].
    """
    H = p["w_hh_l0"].shape[1]
    D = p["w_ih_l0"].shape[1]
    O = p["w_fc"].shape[0]

    def gate_cols(w):                 # PyTorch (4H, K) -> transposed (K, 4H) -> i, f, g, o blocks
        wt = w.T
        return wt[:, 0:H], wt[:, H:2 * H], wt[:, 2 * H:3 * H], wt[:, 3 * H:4 * H]

    i0x, f0x, g0x, o0x = gate_cols(p["w_ih_l0"])   # (D, H) each
    i0h, f0h, g0h, o0h = gate_cols(p["w_hh_l0"])   # (H, H)
    i1x, f1x, g1x, o1x = gate_cols(p["w_ih_l1"])   # (H, H)
    i1h, f1h, g1h, o1h = gate_cols(p["w_hh_l1"])   # (H, H)

    zD = jnp.zeros((D, H), jnp.float32)
    zH = jnp.zeros((H, H), jnp.float32)

    # Hoisted input-projection weight: layer-1 column blocks are zero (layer-1 gets only b1 there).
    w_x_big = jnp.concatenate([i0x, zD, f0x, zD, o0x, zD, g0x, zD], axis=1)          # (D, 8H)

    # Fused recurrent weight  W_big = [[W_hh0, W_ih1], [0, W_hh1]]  in the joint column layout.
    w_big = jnp.concatenate([
        jnp.concatenate([i0h, i1x, f0h, f1x, o0h, o1x, g0h, g1x], axis=1),           # rows: h0 dims
        jnp.concatenate([zH,  i1h, zH,  f1h, zH,  o1h, zH,  g1h], axis=1),           # rows: h1 dims
    ], axis=0)                                                                        # (2H, 8H)

    b0 = p["b_ih_l0"] + p["b_hh_l0"]
    b1 = p["b_ih_l1"] + p["b_hh_l1"]

    def bblk(b):
        return b[0:H], b[H:2 * H], b[2 * H:3 * H], b[3 * H:4 * H]

    b0i, b0f, b0g, b0o = bblk(b0)
    b1i, b1f, b1g, b1o = bblk(b1)
    b_big = jnp.concatenate([b0i, b1i, b0f, b1f, b0o, b1o, b0g, b1g]).reshape(1, 8 * H)

    return {
        "w_x_big": w_x_big,                       # (D, 8H)
        "b_big": b_big,                           # (1, 8H)
        "w_big": w_big,                           # (2H, 8H)
        "w_fc": p["w_fc"].T,                      # (H, O)
        "b_fc": p["b_fc"].reshape(1, O),          # (1, O)
    }


def _reference_forward(x, p):
    """Pure-JAX f32 reference of the PyTorch module (correctness sanity check)."""
    B, T, _ = x.shape
    H = p["w_hh_l0"].shape[1]

    def cell(x_t, h, c, wih, whh, bih, bhh):
        g = x_t @ wih.T + h @ whh.T + bih + bhh
        i = jax.nn.sigmoid(g[:, 0:H])
        f = jax.nn.sigmoid(g[:, H:2 * H])
        gg = jnp.tanh(g[:, 2 * H:3 * H])
        o = jax.nn.sigmoid(g[:, 3 * H:4 * H])
        c = f * c + i * gg
        return o * jnp.tanh(c), c

    h0 = c0 = h1 = c1 = jnp.zeros((B, H), jnp.float32)
    for t in range(T):
        h0, c0 = cell(x[:, t, :], h0, c0,
                      p["w_ih_l0"], p["w_hh_l0"], p["b_ih_l0"], p["b_hh_l0"])
        h1, c1 = cell(h0, h1, c1,
                      p["w_ih_l1"], p["w_hh_l1"], p["b_ih_l1"], p["b_hh_l1"])
    return h1 @ p["w_fc"].T + p["b_fc"]


if __name__ == "__main__":
    # Small shapes consistent with the module: vocab (input_size == output_size) = 32,
    # hidden_size = 32, num_layers = 2, batch = 2, seq = 8.
    B, T = 2, 8
    INPUT_SIZE = 32
    HIDDEN_SIZE = 32
    OUTPUT_SIZE = 32

    key = jax.random.PRNGKey(0)
    k_x, k_p = jax.random.split(key)
    x = jax.random.normal(k_x, (B, T, INPUT_SIZE), jnp.float32)
    params = init_params(k_p, INPUT_SIZE, HIDDEN_SIZE, OUTPUT_SIZE)
    packed = pack_params(params)

    out = music_lstm_forward(x, packed)
    out = jax.block_until_ready(out)

    ref = _reference_forward(x, params)
    assert out.shape == (B, OUTPUT_SIZE)
    assert jnp.allclose(out, ref, atol=2e-2, rtol=2e-2), "mismatch vs JAX reference"

    print("KERNEL_OK")
</pallas_src>

<mosaic_0001>
module attributes {stable_mosaic.version = 11 : i64} {
  func.func @_music_lstm_kernel(%arg0: memref<72x32xbf16, #tpu.memory_space<vmem>>, %arg1: memref<32x256xbf16, #tpu.memory_space<vmem>>, %arg2: memref<1x256xf32, #tpu.memory_space<vmem>>, %arg3: memref<64x256xbf16, #tpu.memory_space<vmem>>, %arg4: memref<32x32xbf16, #tpu.memory_space<vmem>>, %arg5: memref<1x32xf32, #tpu.memory_space<vmem>>, %arg6: memref<8x32xf32, #tpu.memory_space<vmem>>, %arg7: memref<72x256xf32, #tpu.memory_space<vmem>>) attributes {dimension_semantics = [], scalar_prefetch = 0 : i64, scratch_operands = 1 : i64, tpu.core_type = #tpu.core_type<tc>} {
    %c0 = arith.constant 0 : index
    %c0_0 = arith.constant 0 : index
    %0 = vector.load %arg0[%c0, %c0_0] : memref<72x32xbf16, #tpu.memory_space<vmem>>, vector<72x32xbf16>
    %c0_1 = arith.constant 0 : index
    %c0_2 = arith.constant 0 : index
    %1 = vector.load %arg1[%c0_1, %c0_2] : memref<32x256xbf16, #tpu.memory_space<vmem>>, vector<32x256xbf16>
    %cst = arith.constant dense<0.000000e+00> : vector<72x256xf32>
    %2 = tpu.matmul %0, %1, %cst {dimension_numbers = #tpu.dot_dimension_numbers<[1], [0], [0], [1], [0, 0, 1, 1], [], []>} : vector<72x32xbf16>, vector<32x256xbf16>, vector<72x256xf32> -> vector<72x256xf32>
    %c0_3 = arith.constant 0 : index
    %c0_4 = arith.constant 0 : index
    %3 = vector.load %arg2[%c0_3, %c0_4] : memref<1x256xf32, #tpu.memory_space<vmem>>, vector<1x256xf32>
    %4 = vector.broadcast %3 : vector<1x256xf32> to vector<72x256xf32>
    %5 = arith.addf %2, %4 : vector<72x256xf32>
    %c0_5 = arith.constant 0 : index
    %c0_6 = arith.constant 0 : index
    %6 = vector.load %arg7[%c0_5, %c0_6] : memref<72x256xf32, #tpu.memory_space<vmem>>, vector<72x256xf32>
    tpu.vector_store %arg7[%c0_5, %c0_6], %5 {strides = array<i32>} : memref<72x256xf32, #tpu.memory_space<vmem>>, vector<72x256xf32>,
    %c0_7 = arith.constant 0 : index
    %c0_8 = arith.constant 0 : index
    %7 = vector.load %arg3[%c0_7, %c0_8] : memref<64x256xbf16, #tpu.memory_space<vmem>>, vector<64x256xbf16>
    %cst_9 = arith.constant 0.000000e+00 : f32
    %8 = vector.broadcast %cst_9 : f32 to vector<8x64xf32>
    %c0_10 = arith.constant 0 : index
    %c0_11 = arith.constant 0 : index
    %9 = vector.load %arg7[%c0_10, %c0_11] : memref<72x256xf32, #tpu.memory_space<vmem>>, vector<8x256xf32>
    %10 = vector.extract_strided_slice %9 {offsets = [0, 0], sizes = [8, 192], strides = [1, 1]} : vector<8x256xf32> to vector<8x192xf32>
    %11 = arith.negf %10 : vector<8x192xf32>
    %12 = math.exp %11 : vector<8x192xf32>
    %cst_12 = arith.constant 1.000000e+00 : f32
    %13 = vector.broadcast %cst_12 : f32 to vector<8x192xf32>
    %14 = arith.addf %13, %12 : vector<8x192xf32>
    %15 = arith.divf %13, %14 : vector<8x192xf32>
    %16 = vector.extract_strided_slice %9 {offsets = [0, 192], sizes = [8, 64], strides = [1, 1]} : vector<8x256xf32> to vector<8x64xf32>
    %17 = math.tanh %16 : vector<8x64xf32>
    %18 = vector.extract_strided_slice %15 {offsets = [0, 0], sizes = [8, 64], strides = [1, 1]} : vector<8x192xf32> to vector<8x64xf32>
    %19 = vector.extract_strided_slice %15 {offsets = [0, 64], sizes = [8, 64], strides = [1, 1]} : vector<8x192xf32> to vector<8x64xf32>
    %20 = vector.extract_strided_slice %15 {offsets = [0, 128], sizes = [8, 64], strides = [1, 1]} : vector<8x192xf32> to vector<8x64xf32>
    %21 = arith.mulf %19, %8 : vector<8x64xf32>
    %22 = arith.mulf %18, %17 : vector<8x64xf32>
    %23 = arith.addf %21, %22 : vector<8x64xf32>
    %24 = math.tanh %23 : vector<8x64xf32>
    %25 = arith.mulf %20, %24 : vector<8x64xf32>
    %26 = tpu.iota {dimensions = array<i32: 1>} : vector<8x64xi32>
    %c32_i32 = arith.constant 32 : i32
    %27 = vector.broadcast %c32_i32 : i32 to vector<8x64xi32>
    %28 = arith.cmpi slt, %26, %27 : vector<8x64xi32>
    %cst_13 = arith.constant 0.000000e+00 : f32
    %29 = vector.broadcast %cst_13 : f32 to vector<8x64xf32>
    %30 = arith.select %28, %25, %29 : vector<8x64xi1>, vector<8x64xf32>
    %cst_14 = arith.constant 0.000000e+00 : f32
    %31 = vector.broadcast %cst_14 : f32 to vector<8x64xf32>
    %32 = arith.select %28, %23, %31 : vector<8x64xi1>, vector<8x64xf32>
    %33 = arith.truncf %30 : vector<8x64xf32> to vector<8x64xbf16>
    %cst_15 = arith.constant dense<0.000000e+00> : vector<8x256xf32>
    %34 = tpu.matmul %33, %7, %cst_15 {dimension_numbers = #tpu.dot_dimension_numbers<[1], [0], [0], [1], [0, 0, 1, 1], [], []>} : vector<8x64xbf16>, vector<64x256xbf16>, vector<8x256xf32> -> vector<8x256xf32>
    %c8 = arith.constant 8 : index
    %c0_16 = arith.constant 0 : index
    %35 = vector.load %arg7[%c8, %c0_16] : memref<72x256xf32, #tpu.memory_space<vmem>>, vector<8x256xf32>
    %36 = arith.addf %34, %35 : vector<8x256xf32>
    %37 = vector.extract_strided_slice %36 {offsets = [0, 0], sizes = [8, 192], strides = [1, 1]} : vector<8x256xf32> to vector<8x192xf32>
    %38 = arith.negf %37 : vector<8x192xf32>
    %39 = math.exp %38 : vector<8x192xf32>
    %cst_17 = arith.constant 1.000000e+00 : f32
    %40 = vector.broadcast %cst_17 : f32 to vector<8x192xf32>
    %41 = arith.addf %40, %39 : vector<8x192xf32>
    %42 = arith.divf %40, %41 : vector<8x192xf32>
    %43 = vector.extract_strided_slice %36 {offsets = [0, 192], sizes = [8, 64], strides = [1, 1]} : vector<8x256xf32> to vector<8x64xf32>
    %44 = math.tanh %43 : vector<8x64xf32>
    %45 = vector.extract_strided_slice %42 {offsets = [0, 0], sizes = [8, 64], strides = [1, 1]} : vector<8x192xf32> to vector<8x64xf32>
    %46 = vector.extract_strided_slice %42 {offsets = [0, 64], sizes = [8, 64], strides = [1, 1]} : vector<8x192xf32> to vector<8x64xf32>
    %47 = vector.extract_strided_slice %42 {offsets = [0, 128], sizes = [8, 64], strides = [1, 1]} : vector<8x192xf32> to vector<8x64xf32>
    %48 = arith.mulf %46, %32 : vector<8x64xf32>
    %49 = arith.mulf %45, %44 : vector<8x64xf32>
    %50 = arith.addf %48, %49 : vector<8x64xf32>
    %51 = math.tanh %50 : vector<8x64xf32>
    %52 = arith.mulf %47, %51 : vector<8x64xf32>
    %53 = arith.truncf %52 : vector<8x64xf32> to vector<8x64xbf16>
    %cst_18 = arith.constant dense<0.000000e+00> : vector<8x256xf32>
    %54 = tpu.matmul %53, %7, %cst_18 {dimension_numbers = #tpu.dot_dimension_numbers<[1], [0], [0], [1], [0, 0, 1, 1], [], []>} : vector<8x64xbf16>, vector<64x256xbf16>, vector<8x256xf32> -> vector<8x256xf32>
    %c16 = arith.constant 16 : index
    %c0_19 = arith.constant 0 : index
    %55 = vector.load %arg7[%c16, %c0_19] : memref<72x256xf32, #tpu.memory_space<vmem>>, vector<8x256xf32>
    %56 = arith.addf %54, %55 : vector<8x256xf32>
    %57 = vector.extract_strided_slice %56 {offsets = [0, 0], sizes = [8, 192], strides = [1, 1]} : vector<8x256xf32> to vector<8x192xf32>
    %58 = arith.negf %57 : vector<8x192xf32>
    %59 = math.exp %58 : vector<8x192xf32>
    %cst_20 = arith.constant 1.000000e+00 : f32
    %60 = vector.broadcast %cst_20 : f32 to vector<8x192xf32>
    %61 = arith.addf %60, %59 : vector<8x192xf32>
    %62 = arith.divf %60, %61 : vector<8x192xf32>
    %63 = vector.extract_strided_slice %56 {offsets = [0, 192], sizes = [8, 64], strides = [1, 1]} : vector<8x256xf32> to vector<8x64xf32>
    %64 = math.tanh %63 : vector<8x64xf32>
    %65 = vector.extract_strided_slice %62 {offsets = [0, 0], sizes = [8, 64], strides = [1, 1]} : vector<8x192xf32> to vector<8x64xf32>
    %66 = vector.extract_strided_slice %62 {offsets = [0, 64], sizes = [8, 64], strides = [1, 1]} : vector<8x192xf32> to vector<8x64xf32>
    %67 = vector.extract_strided_slice %62 {offsets = [0, 128], sizes = [8, 64], strides = [1, 1]} : vector<8x192xf32> to vector<8x64xf32>
    %68 = arith.mulf %66, %50 : vector<8x64xf32>
    %69 = arith.mulf %65, %64 : vector<8x64xf32>
    %70 = arith.addf %68, %69 : vector<8x64xf32>
    %71 = math.tanh %70 : vector<8x64xf32>
    %72 = arith.mulf %67, %71 : vector<8x64xf32>
    %73 = arith.truncf %72 : vector<8x64xf32> to vector<8x64xbf16>
    %cst_21 = arith.constant dense<0.000000e+00> : vector<8x256xf32>
    %74 = tpu.matmul %73, %7, %cst_21 {dimension_numbers = #tpu.dot_dimension_numbers<[1], [0], [0], [1], [0, 0, 1, 1], [], []>} : vector<8x64xbf16>, vector<64x256xbf16>, vector<8x256xf32> -> vector<8x256xf32>
    %c24 = arith.constant 24 : index
    %c0_22 = arith.constant 0 : index
    %75 = vector.load %arg7[%c24, %c0_22] : memref<72x256xf32, #tpu.memory_space<vmem>>, vector<8x256xf32>
    %76 = arith.addf %74, %75 : vector<8x256xf32>
    %77 = vector.extract_strided_slice %76 {offsets = [0, 0], sizes = [8, 192], strides = [1, 1]} : vector<8x256xf32> to vector<8x192xf32>
    %78 = arith.negf %77 : vector<8x192xf32>
    %79 = math.exp %78 : vector<8x192xf32>
    %cst_23 = arith.constant 1.000000e+00 : f32
    %80 = vector.broadcast %cst_23 : f32 to vector<8x192xf32>
    %81 = arith.addf %80, %79 : vector<8x192xf32>
    %82 = arith.divf %80, %81 : vector<8x192xf32>
    %83 = vector.extract_strided_slice %76 {offsets = [0, 192], sizes = [8, 64], strides = [1, 1]} : vector<8x256xf32> to vector<8x64xf32>
    %84 = math.tanh %83 : vector<8x64xf32>
    %85 = vector.extract_strided_slice %82 {offsets = [0, 0], sizes = [8, 64], strides = [1, 1]} : vector<8x192xf32> to vector<8x64xf32>
    %86 = vector.extract_strided_slice %82 {offsets = [0, 64], sizes = [8, 64], strides = [1, 1]} : vector<8x192xf32> to vector<8x64xf32>
    %87 = vector.extract_strided_slice %82 {offsets = [0, 128], sizes = [8, 64], strides = [1, 1]} : vector<8x192xf32> to vector<8x64xf32>
    %88 = arith.mulf %86, %70 : vector<8x64xf32>
    %89 = arith.mulf %85, %84 : vector<8x64xf32>
    %90 = arith.addf %88, %89 : vector<8x64xf32>
    %91 = math.tanh %90 : vector<8x64xf32>
    %92 = arith.mulf %87, %91 : vector<8x64xf32>
    %93 = arith.truncf %92 : vector<8x64xf32> to vector<8x64xbf16>
    %cst_24 = arith.constant dense<0.000000e+00> : vector<8x256xf32>
    %94 = tpu.matmul %93, %7, %cst_24 {dimension_numbers = #tpu.dot_dimension_numbers<[1], [0], [0], [1], [0, 0, 1, 1], [], []>} : vector<8x64xbf16>, vector<64x256xbf16>, vector<8x256xf32> -> vector<8x256xf32>
    %c32 = arith.constant 32 : index
    %c0_25 = arith.constant 0 : index
    %95 = vector.load %arg7[%c32, %c0_25] : memref<72x256xf32, #tpu.memory_space<vmem>>, vector<8x256xf32>
    %96 = arith.addf %94, %95 : vector<8x256xf32>
    %97 = vector.extract_strided_slice %96 {offsets = [0, 0], sizes = [8, 192], strides = [1, 1]} : vector<8x256xf32> to vector<8x192xf32>
    %98 = arith.negf %97 : vector<8x192xf32>
    %99 = math.exp %98 : vector<8x192xf32>
    %cst_26 = arith.constant 1.000000e+00 : f32
    %100 = vector.broadcast %cst_26 : f32 to vector<8x192xf32>
    %101 = arith.addf %100, %99 : vector<8x192xf32>
    %102 = arith.divf %100, %101 : vector<8x192xf32>
    %103 = vector.extract_strided_slice %96 {offsets = [0, 192], sizes = [8, 64], strides = [1, 1]} : vector<8x256xf32> to vector<8x64xf32>
    %104 = math.tanh %103 : vector<8x64xf32>
    %105 = vector.extract_strided_slice %102 {offsets = [0, 0], sizes = [8, 64], strides = [1, 1]} : vector<8x192xf32> to vector<8x64xf32>
    %106 = vector.extract_strided_slice %102 {offsets = [0, 64], sizes = [8, 64], strides = [1, 1]} : vector<8x192xf32> to vector<8x64xf32>
    %107 = vector.extract_strided_slice %102 {offsets = [0, 128], sizes = [8, 64], strides = [1, 1]} : vector<8x192xf32> to vector<8x64xf32>
    %108 = arith.mulf %106, %90 : vector<8x64xf32>
    %109 = arith.mulf %105, %104 : vector<8x64xf32>
    %110 = arith.addf %108, %109 : vector<8x64xf32>
    %111 = math.tanh %110 : vector<8x64xf32>
    %112 = arith.mulf %107, %111 : vector<8x64xf32>
    %113 = arith.truncf %112 : vector<8x64xf32> to vector<8x64xbf16>
    %cst_27 = arith.constant dense<0.000000e+00> : vector<8x256xf32>
    %114 = tpu.matmul %113, %7, %cst_27 {dimension_numbers = #tpu.dot_dimension_numbers<[1], [0], [0], [1], [0, 0, 1, 1], [], []>} : vector<8x64xbf16>, vector<64x256xbf16>, vector<8x256xf32> -> vector<8x256xf32>
    %c40 = arith.constant 40 : index
    %c0_28 = arith.constant 0 : index
    %115 = vector.load %arg7[%c40, %c0_28] : memref<72x256xf32, #tpu.memory_space<vmem>>, vector<8x256xf32>
    %116 = arith.addf %114, %115 : vector<8x256xf32>
    %117 = vector.extract_strided_slice %116 {offsets = [0, 0], sizes = [8, 192], strides = [1, 1]} : vector<8x256xf32> to vector<8x192xf32>
    %118 = arith.negf %117 : vector<8x192xf32>
    %119 = math.exp %118 : vector<8x192xf32>
    %cst_29 = arith.constant 1.000000e+00 : f32
    %120 = vector.broadcast %cst_29 : f32 to vector<8x192xf32>
    %121 = arith.addf %120, %119 : vector<8x192xf32>
    %122 = arith.divf %120, %121 : vector<8x192xf32>
    %123 = vector.extract_strided_slice %116 {offsets = [0, 192], sizes = [8, 64], strides = [1, 1]} : vector<8x256xf32> to vector<8x64xf32>
    %124 = math.tanh %123 : vector<8x64xf32>
    %125 = vector.extract_strided_slice %122 {offsets = [0, 0], sizes = [8, 64], strides = [1, 1]} : vector<8x192xf32> to vector<8x64xf32>
    %126 = vector.extract_strided_slice %122 {offsets = [0, 64], sizes = [8, 64], strides = [1, 1]} : vector<8x192xf32> to vector<8x64xf32>
    %127 = vector.extract_strided_slice %122 {offsets = [0, 128], sizes = [8, 64], strides = [1, 1]} : vector<8x192xf32> to vector<8x64xf32>
    %128 = arith.mulf %126, %110 : vector<8x64xf32>
    %129 = arith.mulf %125, %124 : vector<8x64xf32>
    %130 = arith.addf %128, %129 : vector<8x64xf32>
    %131 = math.tanh %130 : vector<8x64xf32>
    %132 = arith.mulf %127, %131 : vector<8x64xf32>
    %133 = arith.truncf %132 : vector<8x64xf32> to vector<8x64xbf16>
    %cst_30 = arith.constant dense<0.000000e+00> : vector<8x256xf32>
    %134 = tpu.matmul %133, %7, %cst_30 {dimension_numbers = #tpu.dot_dimension_numbers<[1], [0], [0], [1], [0, 0, 1, 1], [], []>} : vector<8x64xbf16>, vector<64x256xbf16>, vector<8x256xf32> -> vector<8x256xf32>
    %c48 = arith.constant 48 : index
    %c0_31 = arith.constant 0 : index
    %135 = vector.load %arg7[%c48, %c0_31] : memref<72x256xf32, #tpu.memory_space<vmem>>, vector<8x256xf32>
    %136 = arith.addf %134, %135 : vector<8x256xf32>
    %137 = vector.extract_strided_slice %136 {offsets = [0, 0], sizes = [8, 192], strides = [1, 1]} : vector<8x256xf32> to vector<8x192xf32>
    %138 = arith.negf %137 : vector<8x192xf32>
    %139 = math.exp %138 : vector<8x192xf32>
    %cst_32 = arith.constant 1.000000e+00 : f32
    %140 = vector.broadcast %cst_32 : f32 to vector<8x192xf32>
    %141 = arith.addf %140, %139 : vector<8x192xf32>
    %142 = arith.divf %140, %141 : vector<8x192xf32>
    %143 = vector.extract_strided_slice %136 {offsets = [0, 192], sizes = [8, 64], strides = [1, 1]} : vector<8x256xf32> to vector<8x64xf32>
    %144 = math.tanh %143 : vector<8x64xf32>
    %145 = vector.extract_strided_slice %142 {offsets = [0, 0], sizes = [8, 64], strides = [1, 1]} : vector<8x192xf32> to vector<8x64xf32>
    %146 = vector.extract_strided_slice %142 {offsets = [0, 64], sizes = [8, 64], strides = [1, 1]} : vector<8x192xf32> to vector<8x64xf32>
    %147 = vector.extract_strided_slice %142 {offsets = [0, 128], sizes = [8, 64], strides = [1, 1]} : vector<8x192xf32> to vector<8x64xf32>
    %148 = arith.mulf %146, %130 : vector<8x64xf32>
    %149 = arith.mulf %145, %144 : vector<8x64xf32>
    %150 = arith.addf %148, %149 : vector<8x64xf32>
    %151 = math.tanh %150 : vector<8x64xf32>
    %152 = arith.mulf %147, %151 : vector<8x64xf32>
    %153 = arith.truncf %152 : vector<8x64xf32> to vector<8x64xbf16>
    %cst_33 = arith.constant dense<0.000000e+00> : vector<8x256xf32>
    %154 = tpu.matmul %153, %7, %cst_33 {dimension_numbers = #tpu.dot_dimension_numbers<[1], [0], [0], [1], [0, 0, 1, 1], [], []>} : vector<8x64xbf16>, vector<64x256xbf16>, vector<8x256xf32> -> vector<8x256xf32>
    %c56 = arith.constant 56 : index
    %c0_34 = arith.constant 0 : index
    %155 = vector.load %arg7[%c56, %c0_34] : memref<72x256xf32, #tpu.memory_space<vmem>>, vector<8x256xf32>
    %156 = arith.addf %154, %155 : vector<8x256xf32>
    %157 = vector.extract_strided_slice %156 {offsets = [0, 0], sizes = [8, 192], strides = [1, 1]} : vector<8x256xf32> to vector<8x192xf32>
    %158 = arith.negf %157 : vector<8x192xf32>
    %159 = math.exp %158 : vector<8x192xf32>
    %cst_35 = arith.constant 1.000000e+00 : f32
    %160 = vector.broadcast %cst_35 : f32 to vector<8x192xf32>
    %161 = arith.addf %160, %159 : vector<8x192xf32>
    %162 = arith.divf %160, %161 : vector<8x192xf32>
    %163 = vector.extract_strided_slice %156 {offsets = [0, 192], sizes = [8, 64], strides = [1, 1]} : vector<8x256xf32> to vector<8x64xf32>
    %164 = math.tanh %163 : vector<8x64xf32>
    %165 = vector.extract_strided_slice %162 {offsets = [0, 0], sizes = [8, 64], strides = [1, 1]} : vector<8x192xf32> to vector<8x64xf32>
    %166 = vector.extract_strided_slice %162 {offsets = [0, 64], sizes = [8, 64], strides = [1, 1]} : vector<8x192xf32> to vector<8x64xf32>
    %167 = vector.extract_strided_slice %162 {offsets = [0, 128], sizes = [8, 64], strides = [1, 1]} : vector<8x192xf32> to vector<8x64xf32>
    %168 = arith.mulf %166, %150 : vector<8x64xf32>
    %169 = arith.mulf %165, %164 : vector<8x64xf32>
    %170 = arith.addf %168, %169 : vector<8x64xf32>
    %171 = math.tanh %170 : vector<8x64xf32>
    %172 = arith.mulf %167, %171 : vector<8x64xf32>
    %173 = arith.truncf %172 : vector<8x64xf32> to vector<8x64xbf16>
    %cst_36 = arith.constant dense<0.000000e+00> : vector<8x256xf32>
    %174 = tpu.matmul %173, %7, %cst_36 {dimension_numbers = #tpu.dot_dimension_numbers<[1], [0], [0], [1], [0, 0, 1, 1], [], []>} : vector<8x64xbf16>, vector<64x256xbf16>, vector<8x256xf32> -> vector<8x256xf32>
    %c64 = arith.constant 64 : index
    %c0_37 = arith.constant 0 : index
    %175 = vector.load %arg7[%c64, %c0_37] : memref<72x256xf32, #tpu.memory_space<vmem>>, vector<8x256xf32>
    %176 = arith.addf %174, %175 : vector<8x256xf32>
    %177 = vector.extract_strided_slice %176 {offsets = [0, 0], sizes = [8, 192], strides = [1, 1]} : vector<8x256xf32> to vector<8x192xf32>
    %178 = arith.negf %177 : vector<8x192xf32>
    %179 = math.exp %178 : vector<8x192xf32>
    %cst_38 = arith.constant 1.000000e+00 : f32
    %180 = vector.broadcast %cst_38 : f32 to vector<8x192xf32>
    %181 = arith.addf %180, %179 : vector<8x192xf32>
    %182 = arith.divf %180, %181 : vector<8x192xf32>
    %183 = vector.extract_strided_slice %176 {offsets = [0, 192], sizes = [8, 64], strides = [1, 1]} : vector<8x256xf32> to vector<8x64xf32>
    %184 = math.tanh %183 : vector<8x64xf32>
    %185 = vector.extract_strided_slice %182 {offsets = [0, 0], sizes = [8, 64], strides = [1, 1]} : vector<8x192xf32> to vector<8x64xf32>
    %186 = vector.extract_strided_slice %182 {offsets = [0, 64], sizes = [8, 64], strides = [1, 1]} : vector<8x192xf32> to vector<8x64xf32>
    %187 = vector.extract_strided_slice %182 {offsets = [0, 128], sizes = [8, 64], strides = [1, 1]} : vector<8x192xf32> to vector<8x64xf32>
    %188 = arith.mulf %186, %170 : vector<8x64xf32>
    %189 = arith.mulf %185, %184 : vector<8x64xf32>
    %190 = arith.addf %188, %189 : vector<8x64xf32>
    %191 = math.tanh %190 : vector<8x64xf32>
    %192 = arith.mulf %187, %191 : vector<8x64xf32>
    %193 = vector.extract_strided_slice %192 {offsets = [0, 32], sizes = [8, 32], strides = [1, 1]} : vector<8x64xf32> to vector<8x32xf32>
    %194 = arith.truncf %193 : vector<8x32xf32> to vector<8x32xbf16>
    %c0_39 = arith.constant 0 : index
    %c0_40 = arith.constant 0 : index
    %195 = vector.load %arg4[%c0_39, %c0_40] : memref<32x32xbf16, #tpu.memory_space<vmem>>, vector<32x32xbf16>
    %cst_41 = arith.constant dense<0.000000e+00> : vector<8x32xf32>
    %196 = tpu.matmul %194, %195, %cst_41 {dimension_numbers = #tpu.dot_dimension_numbers<[1], [0], [0], [1], [0, 0, 1, 1], [], []>} : vector<8x32xbf16>, vector<32x32xbf16>, vector<8x32xf32> -> vector<8x32xf32>
    %c0_42 = arith.constant 0 : index
    %c0_43 = arith.constant 0 : index
    %197 = vector.load %arg5[%c0_42, %c0_43] : memref<1x32xf32, #tpu.memory_space<vmem>>, vector<1x32xf32>
    %198 = vector.broadcast %197 : vector<1x32xf32> to vector<8x32xf32>
    %199 = arith.addf %196, %198 : vector<8x32xf32>
    %c0_44 = arith.constant 0 : index
    %c0_45 = arith.constant 0 : index
    %200 = vector.load %arg6[%c0_44, %c0_45] : memref<8x32xf32, #tpu.memory_space<vmem>>, vector<8x32xf32>
    tpu.vector_store %arg6[%c0_44, %c0_45], %199 {strides = array<i32>} : memref<8x32xf32, #tpu.memory_space<vmem>>, vector<8x32xf32>,
    return
  }
}

</mosaic_0001>

<llo_original>
// kernel: tpu_custom_call.1
$region0: #{tpu_custom_call.1}
  #allocation0 [shape = 'u32[]', space=smem, size = 0x4, offset = 0x4, fixed_abs, tag = 'smem constant byte address 0x4 - core index']
  #allocation1 [shape = 'u32[72,128]{1,0:T(1,128)}', space=vmem, size = 0x9000, scoped, tag = 'internal scratch']
  #allocation2 [shape = 'f32[72,256]{1,0:T(8,128)}', space=vmem, size = 0x12000, scoped, tag = 'scratch operand']
  %s0 = inlined_call_operand.vmem [shape: bf16[72,32], index: 0, kind: input, shape index: {}]
  %s1 = inlined_call_operand.vmem [shape: bf16[32,256], index: 1, kind: input, shape index: {}]
  %s2 = inlined_call_operand.vmem [shape: f32[1,256], index: 2, kind: input, shape index: {}]
  %s3 = inlined_call_operand.hbm [shape: bf16[64,256], index: 3, kind: input, shape index: {}]
  %s4 = inlined_call_operand.vmem [shape: bf16[32,32], index: 4, kind: input, shape index: {}]
  %s5 = inlined_call_operand.vmem [shape: f32[1,32], index: 5, kind: input, shape index: {}]
  %s6 = inlined_call_operand.hbm [shape: f32[8,32], index: 6, kind: output, shape index: {}]
  %s7 = sld [smem:[#allocation0]]
  $region38: #{tpu_custom_call.1} parent=0
    _
  %s9 = ssub.s32 1, %s7
  %s10 = scalar_select 0, %s9, %s7
  $region1: #{tpu_custom_call.1} parent=0
    #allocation3 [shape = 'u8[32768]{0}', space=vmem, size = 0x8000, scoped, tag = 'input window, operand 3, single buffered']
    #allocation4 [shape = 's32[1]{0}', space=sflag, size = 0x4, scoped, tag = 'scoped memory for tpu_custom_call.1']
    #allocation5 [shape = 's32[1]{0}', space=sflag, size = 0x4, scoped, tag = 'scoped memory for tpu_custom_call.1']
    #allocation6 [shape = 'u8[4096]{0}', space=vmem, size = 0x1000, scoped, tag = 'output window, operand 0, single buffered']
    %11 = vsyncpa [#allocation4], 0
    %12 = vsyncpa [#allocation5], 0
    // Predicated region
    $region2: #{tpu_custom_call.1} parent=1 // pred_check
      _
    $region3: #{tpu_custom_call.1} parent=1 // pred_check_branch
      %14 = sbr.rel (0) target = $region5
    $region4: #{tpu_custom_call.1} parent=1 // pred_region
      _
    $region5: #{tpu_custom_call.1} parent=1 // pred_fallthru
      _
    // Predicated region
    $region6: #{tpu_custom_call.1} parent=1 // pred_check
      _
    $region7: #{tpu_custom_call.1} parent=1 // pred_check_branch
      %16 = sbr.rel (0) target = $region9
    $region8: #{tpu_custom_call.1} parent=1 // pred_region
      _
    $region9: #{tpu_custom_call.1} parent=1 // pred_fallthru
      _
    // Predicated region
    $region10: #{tpu_custom_call.1} parent=1 // pred_check
      _
    $region11: #{tpu_custom_call.1} parent=1 // pred_check_branch
      %18 = sbr.rel (0) target = $region13
    $region12: #{tpu_custom_call.1} parent=1 // pred_region
      _
    $region13: #{tpu_custom_call.1} parent=1 // pred_fallthru
      _
    // Predicated region
    $region14: #{tpu_custom_call.1} parent=1 // pred_check
      _
    $region15: #{tpu_custom_call.1} parent=1 // pred_check_branch
      %20 = sbr.rel (0) target = $region17
    $region16: #{tpu_custom_call.1} parent=1 // pred_region
      %22 = vsyncadd [#allocation4], 0
      %s23 = sshll.u32 %s3, 4
      %s24 = int_to_ptr.hbm [resolvable:$true] %s23
      %s25 = sshll.u32 [#allocation3], 4
      %s26 = int_to_ptr.vmem [resolvable:$true] %s25
      %31 = dma.hbm_to_vmem [thread:$0]  %s24, 1024, %s26, [#allocation4], 128, 128, 8
    $region17: #{tpu_custom_call.1} parent=1 // pred_fallthru
      _
    // Predicated region
    $region18: #{tpu_custom_call.1} parent=1 // pred_check
      _
    $region19: #{tpu_custom_call.1} parent=1 // pred_check_branch
      %33 = sbr.rel (0) target = $region21
    $region20: #{tpu_custom_call.1} parent=1 // pred_region
      _
    $region21: #{tpu_custom_call.1} parent=1 // pred_fallthru
      _
    // Predicated region
    $region22: #{tpu_custom_call.1} parent=1 // pred_check
      _
    $region23: #{tpu_custom_call.1} parent=1 // pred_check_branch
      %35 = sbr.rel (0) target = $region25
    $region24: #{tpu_custom_call.1} parent=1 // pred_region
      _
    $region25: #{tpu_custom_call.1} parent=1 // pred_fallthru
      _
    // Predicated region
    $region26: #{tpu_custom_call.1} parent=1 // pred_check
      _
    $region27: #{tpu_custom_call.1} parent=1 // pred_check_branch
      %37 = sbr.rel (0) target = $region29
    $region28: #{tpu_custom_call.1} parent=1 // pred_region
      %39 = dma.done [#allocation4], 1024
    $region29: #{tpu_custom_call.1} parent=1 // pred_fallthru
      _
    %v41 = vld [vmem:[%s0] sm:$0xf]
    %v42 = vld [vmem:[%s0 + $0x4] sm:$0xf]
    %v43 = vld [vmem:[%s0 + $0x8] sm:$0xf]
    %v44 = vld [vmem:[%s0 + $0xc] sm:$0xf]
    %v45 = vld [vmem:[%s0 + $0x10] sm:$0xf]
    %v46 = vld [vmem:[%s0 + $0x14] sm:$0xf]
    %v47 = vld [vmem:[%s0 + $0x18] sm:$0xf]
    %v48 = vld [vmem:[%s0 + $0x1c] sm:$0xf]
    %v49 = vld [vmem:[%s0 + $0x20] sm:$0xf]
    %v50 = vld [vmem:[%s1] sm:$0xff]
    %v51 = vld [vmem:[%s1 + $0x8] sm:$0xff]
    %v52 = vld [vmem:[%s1 + $0x10] sm:$0xff]
    %v53 = vld [vmem:[%s1 + $0x18] sm:$0xff]
    %v54 = vld [vmem:[%s2] sm:$0x3]
    %v56 = vperm.slane %v54, 0
    %v57 = vperm.slane %v54, 1
    %v69 = vunpack.c.l.b16 %v41
    %v70 = vunpack.c.l.b16 %v42
    %v71 = vunpack.c.l.b16 %v43
    %v72 = vunpack.c.l.b16 %v44
    %v73 = vunpack.c.l.b16 %v45
    %v74 = vunpack.c.l.b16 %v46
    %v75 = vunpack.c.l.b16 %v47
    %v76 = vunpack.c.l.b16 %v48
    %v77 = vunpack.c.l.b16 %v49
    %v78 = vpack.c.b16 %v70, %v69
    %v79 = vpack.c.b16 %v72, %v71
    %v80 = vpack.c.b16 %v74, %v73
    %v81 = vpack.c.b16 %v76, %v75
    %v82 = vpack.c.b16 %v77, %v77
    %v87 = vunpack.c.l.b16 %v50
    %v88 = vunpack.c.h.b16 %v50
    %v89 = vunpack.c.l.b16 %v51
    %v90 = vunpack.c.h.b16 %v51
    %v91 = vunpack.c.l.b16 %v52
    %v92 = vunpack.c.h.b16 %v52
    %v93 = vunpack.c.l.b16 %v53
    %v94 = vunpack.c.h.b16 %v53
    %v95 = vpack.c.b16 %v89, %v87
    %v96 = vpack.c.b16 %v90, %v88
    %v97 = vpack.c.b16 %v93, %v91
    %v98 = vpack.c.b16 %v94, %v92
    %vm103 = vcmask 261120
    %v105 = vsel %vm103, %v78, 0
    %v108 = vsel %vm103, %v79, 0
    %v111 = vsel %vm103, %v80, 0
    %v114 = vsel %vm103, %v81, 0
    %v117 = vsel %vm103, %v82, 0
    %119 = vmatpush.bf16.msra.mxu0 0
    %120 = vmatpush.bf16.msra.mxu0 0
    %121 = vmatpush.bf16.msra.mxu0 0
    %122 = vmatpush.bf16.msra.mxu0 0
    %123 = vmatpush.bf16.msra.mxu0 0
    %124 = vmatpush.bf16.msra.mxu0 0
    %125 = vmatpush.bf16.msra.mxu0 %v97
    %126 = vmatpush.bf16.msra.mxu0 %v95
    %127 = vmatmul.bf16.gmra.mxu0 %v105
    %v128 = vpop.f32.mrf.mxu0
    %v129 = vadd.f32 %v56, %v128
    %v130 = vpop.f32.mrf.mxu0
    %v131 = vadd.f32 %v56, %v130
    %132 = vmatmul.bf16.gmra.mxu0 %v108
    %v133 = vpop.f32.mrf.mxu0
    %v134 = vadd.f32 %v56, %v133
    %v135 = vpop.f32.mrf.mxu0
    %v136 = vadd.f32 %v56, %v135
    %137 = vmatmul.bf16.gmra.mxu0 %v111
    %v138 = vpop.f32.mrf.mxu0
    %v139 = vadd.f32 %v56, %v138
    %v140 = vpop.f32.mrf.mxu0
    %v141 = vadd.f32 %v56, %v140
    %142 = vmatmul.bf16.gmra.mxu0 %v114
    %v143 = vpop.f32.mrf.mxu0
    %v144 = vadd.f32 %v56, %v143
    %v145 = vpop.f32.mrf.mxu0
    %v146 = vadd.f32 %v56, %v145
    %147 = vmatmul.bf16.gmra.mxu0 %v117
    %v148 = vpop.f32.mrf.mxu0
    %v149 = vadd.f32 %v56, %v148
    %v150 = vpop.f32.mrf.mxu0
    %151 = vdwg.mxu0
    %152 = vmatpush.bf16.msra.mxu0 0
    %153 = vmatpush.bf16.msra.mxu0 0
    %154 = vmatpush.bf16.msra.mxu0 0
    %155 = vmatpush.bf16.msra.mxu0 0
    %156 = vmatpush.bf16.msra.mxu0 0
    %157 = vmatpush.bf16.msra.mxu0 0
    %158 = vmatpush.bf16.msra.mxu0 %v98
    %159 = vmatpush.bf16.msra.mxu0 %v96
    %160 = vmatmul.bf16.gmra.mxu0 %v105
    %v161 = vpop.f32.mrf.mxu0
    %v162 = vadd.f32 %v57, %v161
    %v163 = vpop.f32.mrf.mxu0
    %v164 = vadd.f32 %v57, %v163
    %165 = vmatmul.bf16.gmra.mxu0 %v108
    %v166 = vpop.f32.mrf.mxu0
    %v167 = vadd.f32 %v57, %v166
    %v168 = vpop.f32.mrf.mxu0
    %v169 = vadd.f32 %v57, %v168
    %170 = vmatmul.bf16.gmra.mxu0 %v111
    %v171 = vpop.f32.mrf.mxu0
    %v172 = vadd.f32 %v57, %v171
    %v173 = vpop.f32.mrf.mxu0
    %v174 = vadd.f32 %v57, %v173
    %175 = vmatmul.bf16.gmra.mxu0 %v114
    %v176 = vpop.f32.mrf.mxu0
    %v177 = vadd.f32 %v57, %v176
    %v178 = vpop.f32.mrf.mxu0
    %v179 = vadd.f32 %v57, %v178
    %180 = vmatmul.bf16.gmra.mxu0 %v117
    %v181 = vpop.f32.mrf.mxu0
    %v182 = vadd.f32 %v57, %v181
    %v183 = vpop.f32.mrf.mxu0
    %184 = vdwg.mxu0
    %185 = vst [vmem:[#allocation2] sm:$0xff] %v129
    %186 = vst [vmem:[#allocation2 + $0x8] sm:$0xff] %v162
    %187 = vst [vmem:[#allocation2 + $0x10] sm:$0xff] %v131
    %188 = vst [vmem:[#allocation2 + $0x18] sm:$0xff] %v164
    %189 = vst [vmem:[#allocation2 + $0x20] sm:$0xff] %v134
    %190 = vst [vmem:[#allocation2 + $0x28] sm:$0xff] %v167
    %191 = vst [vmem:[#allocation2 + $0x30] sm:$0xff] %v136
    %192 = vst [vmem:[#allocation2 + $0x38] sm:$0xff] %v169
    %193 = vst [vmem:[#allocation2 + $0x40] sm:$0xff] %v139
    %194 = vst [vmem:[#allocation2 + $0x48] sm:$0xff] %v172
    %195 = vst [vmem:[#allocation2 + $0x50] sm:$0xff] %v141
    %196 = vst [vmem:[#allocation2 + $0x58] sm:$0xff] %v174
    %197 = vst [vmem:[#allocation2 + $0x60] sm:$0xff] %v144
    %198 = vst [vmem:[#allocation2 + $0x68] sm:$0xff] %v177
    %199 = vst [vmem:[#allocation2 + $0x70] sm:$0xff] %v146
    %200 = vst [vmem:[#allocation2 + $0x78] sm:$0xff] %v179
    %201 = vst [vmem:[#allocation2 + $0x80] sm:$0xff] %v149
    %202 = vst [vmem:[#allocation2 + $0x88] sm:$0xff] %v182
    %v203 = vld [vmem:[#allocation3] sm:$0xff]
    %v204 = vld [vmem:[#allocation3 + $0x8] sm:$0xff]
    %v205 = vld [vmem:[#allocation3 + $0x10] sm:$0xff]
    %v206 = vld [vmem:[#allocation3 + $0x18] sm:$0xff]
    %v207 = vld [vmem:[#allocation3 + $0x20] sm:$0xff]
    %v208 = vld [vmem:[#allocation3 + $0x28] sm:$0xff]
    %v209 = vld [vmem:[#allocation3 + $0x30] sm:$0xff]
    %v210 = vld [vmem:[#allocation3 + $0x38] sm:$0xff]
    %v211 = vld [vmem:[#allocation2] sm:$0xff]
    %v212 = vld [vmem:[#allocation2 + $0x8] sm:$0xff]
    %v213 = vxor.u32 %v211, 2147483648
    %v214 = vxor.u32 %v212, 2147483648
    %v215 = vmul.f32 %v213, 1.442695
    %v216 = vpow.pop %v215
    %v217 = vmul.f32 %v214, 1.442695
    %v218 = vpow.pop %v217
    %v219 = vadd.f32 %v216, 1.0
    %v220 = vadd.f32 %v218, 1.0
    %v221 = vrcp.pop %v219
    %v222 = vmul.f32 %v219, %v221
    %v223 = vsub.f32 1.0, %v222
    %v224 = vmul.f32 %v221, %v223
    %v225 = vadd.f32 %v221, %v224
    %vm226 = vweird.f32 %v219
    %vm227 = vweird.f32 %v221
    %vm228 = vmor %vm226, %vm227
    %v229 = vsel %vm228, %v221, %v225
    %v230 = vand.u32 2147483647, %v219
    %vm231 = vcmp.eq.f32.partialorder %v230, 8.507059e+37
    %v232 = vand.u32 %v219, 2147483648
    %v233 = vor.u32 1.1754944e-38, %v232
    %v234 = vsel %vm231, %v233, %v229
    %v235 = vmul.f32 1.0, %v234
    %v236 = vrcp.pop %v220
    %v237 = vmul.f32 %v220, %v236
    %v238 = vsub.f32 1.0, %v237
    %v239 = vmul.f32 %v236, %v238
    %v240 = vadd.f32 %v236, %v239
    %vm241 = vweird.f32 %v220
    %vm242 = vweird.f32 %v236
    %vm243 = vmor %vm241, %vm242
    %v244 = vsel %vm243, %v236, %v240
    %v245 = vand.u32 2147483647, %v220
    %vm246 = vcmp.eq.f32.partialorder %v245, 8.507059e+37
    %v247 = vand.u32 %v220, 2147483648
    %v248 = vor.u32 1.1754944e-38, %v247
    %v249 = vsel %vm246, %v248, %v244
    %v250 = vmul.f32 1.0, %v249
    %v251 = vtanh.pop %v212
    %v252 = vmul.f32 %v235, 0.0
    %254 = vrot.lane.b32.xlu0 %v251, 64
    %v255 = vpop.permute.xlu0 %254
    %v257 = vmul.f32 %v235, %v255
    %259 = vrot.lane.b32.xlu0 %v257, 64
    %v260 = vpop.permute.xlu0 %259
    %v262 = vadd.f32 %v252, %v260
    %v263 = vtanh.pop %v262
    %265 = vrot.lane.b32.xlu0 %v263, 64
    %v266 = vpop.permute.xlu0 %265
    %v268 = vmul.f32 %v250, %v266
    %v269 = vlaneseq
    %v270 = vand.u32 %v269, 127
    %vm271 = vcmp.lt.s32.totalorder %v270, 32
    %v272 = vsel %vm271, %v268, 0.0
    %274 = vrot.lane.b32.xlu0 %v262, 64
    %v275 = vpop.permute.xlu0 %274
    %v277 = vsel %vm271, %v275, 0.0
    %v278 = vpack.c.bf16 %v272, %v272
    %v279 = vld [vmem:[#allocation2 + $0x10] sm:$0xff]
    %v280 = vld [vmem:[#allocation2 + $0x18] sm:$0xff]
    %v289 = vunpack.c.l.b16 %v203
    %v290 = vunpack.c.h.b16 %v203
    %v291 = vunpack.c.l.b16 %v204
    %v292 = vunpack.c.h.b16 %v204
    %v293 = vunpack.c.l.b16 %v205
    %v294 = vunpack.c.h.b16 %v205
    %v295 = vunpack.c.l.b16 %v206
    %v296 = vunpack.c.h.b16 %v206
    %v297 = vunpack.c.l.b16 %v207
    %v298 = vunpack.c.h.b16 %v207
    %v299 = vunpack.c.l.b16 %v208
    %v300 = vunpack.c.h.b16 %v208
    %v301 = vunpack.c.l.b16 %v209
    %v302 = vunpack.c.h.b16 %v209
    %v303 = vunpack.c.l.b16 %v210
    %v304 = vunpack.c.h.b16 %v210
    %v305 = vpack.c.b16 %v291, %v289
    %v306 = vpack.c.b16 %v292, %v290
    %v307 = vpack.c.b16 %v295, %v293
    %v308 = vpack.c.b16 %v296, %v294
    %v309 = vpack.c.b16 %v299, %v297
    %v310 = vpack.c.b16 %v300, %v298
    %v311 = vpack.c.b16 %v303, %v301
    %v312 = vpack.c.b16 %v304, %v302
    %vm321 = vcmask 523264
    %v323 = vsel %vm321, %v278, 0
    %325 = vmatpush.bf16.msra.mxu0 0
    %326 = vmatpush.bf16.msra.mxu0 0
    %327 = vmatpush.bf16.msra.mxu0 0
    %328 = vmatpush.bf16.msra.mxu0 0
    %329 = vmatpush.bf16.msra.mxu0 %v311
    %330 = vmatpush.bf16.msra.mxu0 %v309
    %331 = vmatpush.bf16.msra.mxu0 %v307
    %332 = vmatpush.bf16.msra.mxu0 %v305
    %333 = vmatmul.bf16.gmra.mxu0 %v323
    %v334 = vpop.f32.mrf.mxu0
    %v335 = vadd.f32 %v279, %v334
    %v336 = vpop.f32.mrf.mxu0
    %337 = vdwg.mxu0
    %338 = vmatpush.bf16.msra.mxu0 0
    %339 = vmatpush.bf16.msra.mxu0 0
    %340 = vmatpush.bf16.msra.mxu0 0
    %341 = vmatpush.bf16.msra.mxu0 0
    %342 = vmatpush.bf16.msra.mxu0 %v312
    %343 = vmatpush.bf16.msra.mxu0 %v310
    %344 = vmatpush.bf16.msra.mxu0 %v308
    %345 = vmatpush.bf16.msra.mxu0 %v306
    %346 = vmatmul.bf16.gmra.mxu0 %v323
    %v347 = vpop.f32.mrf.mxu0
    %v348 = vadd.f32 %v280, %v347
    %v349 = vpop.f32.mrf.mxu0
    %350 = vdwg.mxu0
    %v351 = vxor.u32 %v335, 2147483648
    %v352 = vxor.u32 %v348, 2147483648
    %v353 = vmul.f32 %v351, 1.442695
    %v354 = vpow.pop %v353
    %v355 = vmul.f32 %v352, 1.442695
    %v356 = vpow.pop %v355
    %v357 = vadd.f32 %v354, 1.0
    %v358 = vadd.f32 %v356, 1.0
    %v359 = vrcp.pop %v357
    %v360 = vmul.f32 %v357, %v359
    %v361 = vsub.f32 1.0, %v360
    %v362 = vmul.f32 %v359, %v361
    %v363 = vadd.f32 %v359, %v362
    %vm364 = vweird.f32 %v357
    %vm365 = vweird.f32 %v359
    %vm366 = vmor %vm364, %vm365
    %v367 = vsel %vm366, %v359, %v363
    %v368 = vand.u32 2147483647, %v357
    %vm369 = vcmp.eq.f32.partialorder %v368, 8.507059e+37
    %v370 = vand.u32 %v357, 2147483648
    %v371 = vor.u32 1.1754944e-38, %v370
    %v372 = vsel %vm369, %v371, %v367
    %v373 = vmul.f32 1.0, %v372
    %v374 = vrcp.pop %v358
    %v375 = vmul.f32 %v358, %v374
    %v376 = vsub.f32 1.0, %v375
    %v377 = vmul.f32 %v374, %v376
    %v378 = vadd.f32 %v374, %v377
    %vm379 = vweird.f32 %v358
    %vm380 = vweird.f32 %v374
    %vm381 = vmor %vm379, %vm380
    %v382 = vsel %vm381, %v374, %v378
    %v383 = vand.u32 2147483647, %v358
    %vm384 = vcmp.eq.f32.partialorder %v383, 8.507059e+37
    %v385 = vand.u32 %v358, 2147483648
    %v386 = vor.u32 1.1754944e-38, %v385
    %v387 = vsel %vm384, %v386, %v382
    %v388 = vmul.f32 1.0, %v387
    %v389 = vtanh.pop %v348
    %391 = vrot.lane.b32.xlu0 %v277, 64
    %v392 = vpop.permute.xlu0 %391
    %v394 = vmul.f32 %v373, %v392
    %396 = vrot.lane.b32.xlu0 %v389, 64
    %v397 = vpop.permute.xlu0 %396
    %v399 = vmul.f32 %v373, %v397
    %401 = vrot.lane.b32.xlu0 %v399, 64
    %v402 = vpop.permute.xlu0 %401
    %v404 = vadd.f32 %v394, %v402
    %v405 = vtanh.pop %v404
    %407 = vrot.lane.b32.xlu0 %v405, 64
    %v408 = vpop.permute.xlu0 %407
    %v410 = vmul.f32 %v388, %v408
    %v411 = vpack.c.bf16 %v410, %v410
    %v412 = vld [vmem:[#allocation2 + $0x20] sm:$0xff]
    %v413 = vld [vmem:[#allocation2 + $0x28] sm:$0xff]
    %v415 = vsel %vm321, %v411, 0
    %417 = vmatpush.bf16.msra.mxu0 0
    %418 = vmatpush.bf16.msra.mxu0 0
    %419 = vmatpush.bf16.msra.mxu0 0
    %420 = vmatpush.bf16.msra.mxu0 0
    %421 = vmatpush.bf16.msra.mxu0 %v311
    %422 = vmatpush.bf16.msra.mxu0 %v309
    %423 = vmatpush.bf16.msra.mxu0 %v307
    %424 = vmatpush.bf16.msra.mxu0 %v305
    %425 = vmatmul.bf16.gmra.mxu0 %v415
    %v426 = vpop.f32.mrf.mxu0
    %v427 = vadd.f32 %v412, %v426
    %v428 = vpop.f32.mrf.mxu0
    %429 = vdwg.mxu0
    %430 = vmatpush.bf16.msra.mxu0 0
    %431 = vmatpush.bf16.msra.mxu0 0
    %432 = vmatpush.bf16.msra.mxu0 0
    %433 = vmatpush.bf16.msra.mxu0 0
    %434 = vmatpush.bf16.msra.mxu0 %v312
    %435 = vmatpush.bf16.msra.mxu0 %v310
    %436 = vmatpush.bf16.msra.mxu0 %v308
    %437 = vmatpush.bf16.msra.mxu0 %v306
    %438 = vmatmul.bf16.gmra.mxu0 %v415
    %v439 = vpop.f32.mrf.mxu0
    %v440 = vadd.f32 %v413, %v439
    %v441 = vpop.f32.mrf.mxu0
    %442 = vdwg.mxu0
    %v443 = vxor.u32 %v427, 2147483648
    %v444 = vxor.u32 %v440, 2147483648
    %v445 = vmul.f32 %v443, 1.442695
    %v446 = vpow.pop %v445
    %v447 = vmul.f32 %v444, 1.442695
    %v448 = vpow.pop %v447
    %v449 = vadd.f32 %v446, 1.0
    %v450 = vadd.f32 %v448, 1.0
    %v451 = vrcp.pop %v449
    %v452 = vmul.f32 %v449, %v451
    %v453 = vsub.f32 1.0, %v452
    %v454 = vmul.f32 %v451, %v453
    %v455 = vadd.f32 %v451, %v454
    %vm456 = vweird.f32 %v449
    %vm457 = vweird.f32 %v451
    %vm458 = vmor %vm456, %vm457
    %v459 = vsel %vm458, %v451, %v455
    %v460 = vand.u32 2147483647, %v449
    %vm461 = vcmp.eq.f32.partialorder %v460, 8.507059e+37
    %v462 = vand.u32 %v449, 2147483648
    %v463 = vor.u32 1.1754944e-38, %v462
    %v464 = vsel %vm461, %v463, %v459
    %v465 = vmul.f32 1.0, %v464
    %v466 = vrcp.pop %v450
    %v467 = vmul.f32 %v450, %v466
    %v468 = vsub.f32 1.0, %v467
    %v469 = vmul.f32 %v466, %v468
    %v470 = vadd.f32 %v466, %v469
    %vm471 = vweird.f32 %v450
    %vm472 = vweird.f32 %v466
    %vm473 = vmor %vm471, %vm472
    %v474 = vsel %vm473, %v466, %v470
    %v475 = vand.u32 2147483647, %v450
    %vm476 = vcmp.eq.f32.partialorder %v475, 8.507059e+37
    %v477 = vand.u32 %v450, 2147483648
    %v478 = vor.u32 1.1754944e-38, %v477
    %v479 = vsel %vm476, %v478, %v474
    %v480 = vmul.f32 1.0, %v479
    %v481 = vtanh.pop %v440
    %v482 = vmul.f32 %v465, %v404
    %484 = vrot.lane.b32.xlu0 %v481, 64
    %v485 = vpop.permute.xlu0 %484
    %v487 = vmul.f32 %v465, %v485
    %489 = vrot.lane.b32.xlu0 %v487, 64
    %v490 = vpop.permute.xlu0 %489
    %v492 = vadd.f32 %v482, %v490
    %v493 = vtanh.pop %v492
    %495 = vrot.lane.b32.xlu0 %v493, 64
    %v496 = vpop.permute.xlu0 %495
    %v498 = vmul.f32 %v480, %v496
    %v499 = vpack.c.bf16 %v498, %v498
    %v500 = vld [vmem:[#allocation2 + $0x30] sm:$0xff]
    %v501 = vld [vmem:[#allocation2 + $0x38] sm:$0xff]
    %v503 = vsel %vm321, %v499, 0
    %505 = vmatpush.bf16.msra.mxu0 0
    %506 = vmatpush.bf16.msra.mxu0 0
    %507 = vmatpush.bf16.msra.mxu0 0
    %508 = vmatpush.bf16.msra.mxu0 0
    %509 = vmatpush.bf16.msra.mxu0 %v311
    %510 = vmatpush.bf16.msra.mxu0 %v309
    %511 = vmatpush.bf16.msra.mxu0 %v307
    %512 = vmatpush.bf16.msra.mxu0 %v305
    %513 = vmatmul.bf16.gmra.mxu0 %v503
    %v514 = vpop.f32.mrf.mxu0
    %v515 = vadd.f32 %v500, %v514
    %v516 = vpop.f32.mrf.mxu0
    %517 = vdwg.mxu0
    %518 = vmatpush.bf16.msra.mxu0 0
    %519 = vmatpush.bf16.msra.mxu0 0
    %520 = vmatpush.bf16.msra.mxu0 0
    %521 = vmatpush.bf16.msra.mxu0 0
    %522 = vmatpush.bf16.msra.mxu0 %v312
    %523 = vmatpush.bf16.msra.mxu0 %v310
    %524 = vmatpush.bf16.msra.mxu0 %v308
    %525 = vmatpush.bf16.msra.mxu0 %v306
    %526 = vmatmul.bf16.gmra.mxu0 %v503
    %v527 = vpop.f32.mrf.mxu0
    %v528 = vadd.f32 %v501, %v527
    %v529 = vpop.f32.mrf.mxu0
    %530 = vdwg.mxu0
    %v531 = vxor.u32 %v515, 2147483648
    %v532 = vxor.u32 %v528, 2147483648
    %v533 = vmul.f32 %v531, 1.442695
    %v534 = vpow.pop %v533
    %v535 = vmul.f32 %v532, 1.442695
    %v536 = vpow.pop %v535
    %v537 = vadd.f32 %v534, 1.0
    %v538 = vadd.f32 %v536, 1.0
    %v539 = vrcp.pop %v537
    %v540 = vmul.f32 %v537, %v539
    %v541 = vsub.f32 1.0, %v540
    %v542 = vmul.f32 %v539, %v541
    %v543 = vadd.f32 %v539, %v542
    %vm544 = vweird.f32 %v537
    %vm545 = vweird.f32 %v539
    %vm546 = vmor %vm544, %vm545
    %v547 = vsel %vm546, %v539, %v543
    %v548 = vand.u32 2147483647, %v537
    %vm549 = vcmp.eq.f32.partialorder %v548, 8.507059e+37
    %v550 = vand.u32 %v537, 2147483648
    %v551 = vor.u32 1.1754944e-38, %v550
    %v552 = vsel %vm549, %v551, %v547
    %v553 = vmul.f32 1.0, %v552
    %v554 = vrcp.pop %v538
    %v555 = vmul.f32 %v538, %v554
    %v556 = vsub.f32 1.0, %v555
    %v557 = vmul.f32 %v554, %v556
    %v558 = vadd.f32 %v554, %v557
    %vm559 = vweird.f32 %v538
    %vm560 = vweird.f32 %v554
    %vm561 = vmor %vm559, %vm560
    %v562 = vsel %vm561, %v554, %v558
    %v563 = vand.u32 2147483647, %v538
    %vm564 = vcmp.eq.f32.partialorder %v563, 8.507059e+37
    %v565 = vand.u32 %v538, 2147483648
    %v566 = vor.u32 1.1754944e-38, %v565
    %v567 = vsel %vm564, %v566, %v562
    %v568 = vmul.f32 1.0, %v567
    %v569 = vtanh.pop %v528
    %v570 = vmul.f32 %v553, %v492
    %572 = vrot.lane.b32.xlu0 %v569, 64
    %v573 = vpop.permute.xlu0 %572
    %v575 = vmul.f32 %v553, %v573
    %577 = vrot.lane.b32.xlu0 %v575, 64
    %v578 = vpop.permute.xlu0 %577
    %v580 = vadd.f32 %v570, %v578
    %v581 = vtanh.pop %v580
    %583 = vrot.lane.b32.xlu0 %v581, 64
    %v584 = vpop.permute.xlu0 %583
    %v586 = vmul.f32 %v568, %v584
    %v587 = vpack.c.bf16 %v586, %v586
    %v588 = vld [vmem:[#allocation2 + $0x40] sm:$0xff]
    %v589 = vld [vmem:[#allocation2 + $0x48] sm:$0xff]
    %v591 = vsel %vm321, %v587, 0
    %593 = vmatpush.bf16.msra.mxu0 0
    %594 = vmatpush.bf16.msra.mxu0 0
    %595 = vmatpush.bf16.msra.mxu0 0
    %596 = vmatpush.bf16.msra.mxu0 0
    %597 = vmatpush.bf16.msra.mxu0 %v311
    %598 = vmatpush.bf16.msra.mxu0 %v309
    %599 = vmatpush.bf16.msra.mxu0 %v307
    %600 = vmatpush.bf16.msra.mxu0 %v305
    %601 = vmatmul.bf16.gmra.mxu0 %v591
    %v602 = vpop.f32.mrf.mxu0
    %v603 = vadd.f32 %v588, %v602
    %v604 = vpop.f32.mrf.mxu0
    %605 = vdwg.mxu0
    %606 = vmatpush.bf16.msra.mxu0 0
    %607 = vmatpush.bf16.msra.mxu0 0
    %608 = vmatpush.bf16.msra.mxu0 0
    %609 = vmatpush.bf16.msra.mxu0 0
    %610 = vmatpush.bf16.msra.mxu0 %v312
    %611 = vmatpush.bf16.msra.mxu0 %v310
    %612 = vmatpush.bf16.msra.mxu0 %v308
    %613 = vmatpush.bf16.msra.mxu0 %v306
    %614 = vmatmul.bf16.gmra.mxu0 %v591
    %v615 = vpop.f32.mrf.mxu0
    %v616 = vadd.f32 %v589, %v615
    %v617 = vpop.f32.mrf.mxu0
    %618 = vdwg.mxu0
    %v619 = vxor.u32 %v603, 2147483648
    %v620 = vxor.u32 %v616, 2147483648
    %v621 = vmul.f32 %v619, 1.442695
    %v622 = vpow.pop %v621
    %v623 = vmul.f32 %v620, 1.442695
    %v624 = vpow.pop %v623
    %v625 = vadd.f32 %v622, 1.0
    %v626 = vadd.f32 %v624, 1.0
    %v627 = vrcp.pop %v625
    %v628 = vmul.f32 %v625, %v627
    %v629 = vsub.f32 1.0, %v628
    %v630 = vmul.f32 %v627, %v629
    %v631 = vadd.f32 %v627, %v630
    %vm632 = vweird.f32 %v625
    %vm633 = vweird.f32 %v627
    %vm634 = vmor %vm632, %vm633
    %v635 = vsel %vm634, %v627, %v631
    %v636 = vand.u32 2147483647, %v625
    %vm637 = vcmp.eq.f32.partialorder %v636, 8.507059e+37
    %v638 = vand.u32 %v625, 2147483648
    %v639 = vor.u32 1.1754944e-38, %v638
    %v640 = vsel %vm637, %v639, %v635
    %v641 = vmul.f32 1.0, %v640
    %v642 = vrcp.pop %v626
    %v643 = vmul.f32 %v626, %v642
    %v644 = vsub.f32 1.0, %v643
    %v645 = vmul.f32 %v642, %v644
    %v646 = vadd.f32 %v642, %v645
    %vm647 = vweird.f32 %v626
    %vm648 = vweird.f32 %v642
    %vm649 = vmor %vm647, %vm648
    %v650 = vsel %vm649, %v642, %v646
    %v651 = vand.u32 2147483647, %v626
    %vm652 = vcmp.eq.f32.partialorder %v651, 8.507059e+37
    %v653 = vand.u32 %v626, 2147483648
    %v654 = vor.u32 1.1754944e-38, %v653
    %v655 = vsel %vm652, %v654, %v650
    %v656 = vmul.f32 1.0, %v655
    %v657 = vtanh.pop %v616
    %v658 = vmul.f32 %v641, %v580
    %660 = vrot.lane.b32.xlu0 %v657, 64
    %v661 = vpop.permute.xlu0 %660
    %v663 = vmul.f32 %v641, %v661
    %665 = vrot.lane.b32.xlu0 %v663, 64
    %v666 = vpop.permute.xlu0 %665
    %v668 = vadd.f32 %v658, %v666
    %v669 = vtanh.pop %v668
    %671 = vrot.lane.b32.xlu0 %v669, 64
    %v672 = vpop.permute.xlu0 %671
    %v674 = vmul.f32 %v656, %v672
    %v675 = vpack.c.bf16 %v674, %v674
    %v676 = vld [vmem:[#allocation2 + $0x50] sm:$0xff]
    %v677 = vld [vmem:[#allocation2 + $0x58] sm:$0xff]
    %v679 = vsel %vm321, %v675, 0
    %681 = vmatpush.bf16.msra.mxu0 0
    %682 = vmatpush.bf16.msra.mxu0 0
    %683 = vmatpush.bf16.msra.mxu0 0
    %684 = vmatpush.bf16.msra.mxu0 0
    %685 = vmatpush.bf16.msra.mxu0 %v311
    %686 = vmatpush.bf16.msra.mxu0 %v309
    %687 = vmatpush.bf16.msra.mxu0 %v307
    %688 = vmatpush.bf16.msra.mxu0 %v305
    %689 = vmatmul.bf16.gmra.mxu0 %v679
    %v690 = vpop.f32.mrf.mxu0
    %v691 = vadd.f32 %v676, %v690
    %v692 = vpop.f32.mrf.mxu0
    %693 = vdwg.mxu0
    %694 = vmatpush.bf16.msra.mxu0 0
    %695 = vmatpush.bf16.msra.mxu0 0
    %696 = vmatpush.bf16.msra.mxu0 0
    %697 = vmatpush.bf16.msra.mxu0 0
    %698 = vmatpush.bf16.msra.mxu0 %v312
    %699 = vmatpush.bf16.msra.mxu0 %v310
    %700 = vmatpush.bf16.msra.mxu0 %v308
    %701 = vmatpush.bf16.msra.mxu0 %v306
    %702 = vmatmul.bf16.gmra.mxu0 %v679
    %v703 = vpop.f32.mrf.mxu0
    %v704 = vadd.f32 %v677, %v703
    %v705 = vpop.f32.mrf.mxu0
    %706 = vdwg.mxu0
    %v707 = vxor.u32 %v691, 2147483648
    %v708 = vxor.u32 %v704, 2147483648
    %v709 = vmul.f32 %v707, 1.442695
    %v710 = vpow.pop %v709
    %v711 = vmul.f32 %v708, 1.442695
    %v712 = vpow.pop %v711
    %v713 = vadd.f32 %v710, 1.0
    %v714 = vadd.f32 %v712, 1.0
    %v715 = vrcp.pop %v713
    %v716 = vmul.f32 %v713, %v715
    %v717 = vsub.f32 1.0, %v716
    %v718 = vmul.f32 %v715, %v717
    %v719 = vadd.f32 %v715, %v718
    %vm720 = vweird.f32 %v713
    %vm721 = vweird.f32 %v715
    %vm722 = vmor %vm720, %vm721
    %v723 = vsel %vm722, %v715, %v719
    %v724 = vand.u32 2147483647, %v713
    %vm725 = vcmp.eq.f32.partialorder %v724, 8.507059e+37
    %v726 = vand.u32 %v713, 2147483648
    %v727 = vor.u32 1.1754944e-38, %v726
    %v728 = vsel %vm725, %v727, %v723
    %v729 = vmul.f32 1.0, %v728
    %v730 = vrcp.pop %v714
    %v731 = vmul.f32 %v714, %v730
    %v732 = vsub.f32 1.0, %v731
    %v733 = vmul.f32 %v730, %v732
    %v734 = vadd.f32 %v730, %v733
    %vm735 = vweird.f32 %v714
    %vm736 = vweird.f32 %v730
    %vm737 = vmor %vm735, %vm736
    %v738 = vsel %vm737, %v730, %v734
    %v739 = vand.u32 2147483647, %v714
    %vm740 = vcmp.eq.f32.partialorder %v739, 8.507059e+37
    %v741 = vand.u32 %v714, 2147483648
    %v742 = vor.u32 1.1754944e-38, %v741
    %v743 = vsel %vm740, %v742, %v738
    %v744 = vmul.f32 1.0, %v743
    %v745 = vtanh.pop %v704
    %v746 = vmul.f32 %v729, %v668
    %748 = vrot.lane.b32.xlu0 %v745, 64
    %v749 = vpop.permute.xlu0 %748
    %v751 = vmul.f32 %v729, %v749
    %753 = vrot.lane.b32.xlu0 %v751, 64
    %v754 = vpop.permute.xlu0 %753
    %v756 = vadd.f32 %v746, %v754
    %v757 = vtanh.pop %v756
    %759 = vrot.lane.b32.xlu0 %v757, 64
    %v760 = vpop.permute.xlu0 %759
    %v762 = vmul.f32 %v744, %v760
    %v763 = vpack.c.bf16 %v762, %v762
    %v764 = vld [vmem:[#allocation2 + $0x60] sm:$0xff]
    %v765 = vld [vmem:[#allocation2 + $0x68] sm:$0xff]
    %v767 = vsel %vm321, %v763, 0
    %769 = vmatpush.bf16.msra.mxu0 0
    %770 = vmatpush.bf16.msra.mxu0 0
    %771 = vmatpush.bf16.msra.mxu0 0
    %772 = vmatpush.bf16.msra.mxu0 0
    %773 = vmatpush.bf16.msra.mxu0 %v311
    %774 = vmatpush.bf16.msra.mxu0 %v309
    %775 = vmatpush.bf16.msra.mxu0 %v307
    %776 = vmatpush.bf16.msra.mxu0 %v305
    %777 = vmatmul.bf16.gmra.mxu0 %v767
    %v778 = vpop.f32.mrf.mxu0
    %v779 = vadd.f32 %v764, %v778
    %v780 = vpop.f32.mrf.mxu0
    %781 = vdwg.mxu0
    %782 = vmatpush.bf16.msra.mxu0 0
    %783 = vmatpush.bf16.msra.mxu0 0
    %784 = vmatpush.bf16.msra.mxu0 0
    %785 = vmatpush.bf16.msra.mxu0 0
    %786 = vmatpush.bf16.msra.mxu0 %v312
    %787 = vmatpush.bf16.msra.mxu0 %v310
    %788 = vmatpush.bf16.msra.mxu0 %v308
    %789 = vmatpush.bf16.msra.mxu0 %v306
    %790 = vmatmul.bf16.gmra.mxu0 %v767
    %v791 = vpop.f32.mrf.mxu0
    %v792 = vadd.f32 %v765, %v791
    %v793 = vpop.f32.mrf.mxu0
    %794 = vdwg.mxu0
    %v795 = vxor.u32 %v779, 2147483648
    %v796 = vxor.u32 %v792, 2147483648
    %v797 = vmul.f32 %v795, 1.442695
    %v798 = vpow.pop %v797
    %v799 = vmul.f32 %v796, 1.442695
    %v800 = vpow.pop %v799
    %v801 = vadd.f32 %v798, 1.0
    %v802 = vadd.f32 %v800, 1.0
    %v803 = vrcp.pop %v801
    %v804 = vmul.f32 %v801, %v803
    %v805 = vsub.f32 1.0, %v804
    %v806 = vmul.f32 %v803, %v805
    %v807 = vadd.f32 %v803, %v806
    %vm808 = vweird.f32 %v801
    %vm809 = vweird.f32 %v803
    %vm810 = vmor %vm808, %vm809
    %v811 = vsel %vm810, %v803, %v807
    %v812 = vand.u32 2147483647, %v801
    %vm813 = vcmp.eq.f32.partialorder %v812, 8.507059e+37
    %v814 = vand.u32 %v801, 2147483648
    %v815 = vor.u32 1.1754944e-38, %v814
    %v816 = vsel %vm813, %v815, %v811
    %v817 = vmul.f32 1.0, %v816
    %v818 = vrcp.pop %v802
    %v819 = vmul.f32 %v802, %v818
    %v820 = vsub.f32 1.0, %v819
    %v821 = vmul.f32 %v818, %v820
    %v822 = vadd.f32 %v818, %v821
    %vm823 = vweird.f32 %v802
    %vm824 = vweird.f32 %v818
    %vm825 = vmor %vm823, %vm824
    %v826 = vsel %vm825, %v818, %v822
    %v827 = vand.u32 2147483647, %v802
    %vm828 = vcmp.eq.f32.partialorder %v827, 8.507059e+37
    %v829 = vand.u32 %v802, 2147483648
    %v830 = vor.u32 1.1754944e-38, %v829
    %v831 = vsel %vm828, %v830, %v826
    %v832 = vmul.f32 1.0, %v831
    %v833 = vtanh.pop %v792
    %v834 = vmul.f32 %v817, %v756
    %836 = vrot.lane.b32.xlu0 %v833, 64
    %v837 = vpop.permute.xlu0 %836
    %v839 = vmul.f32 %v817, %v837
    %841 = vrot.lane.b32.xlu0 %v839, 64
    %v842 = vpop.permute.xlu0 %841
    %v844 = vadd.f32 %v834, %v842
    %v845 = vtanh.pop %v844
    %847 = vrot.lane.b32.xlu0 %v845, 64
    %v848 = vpop.permute.xlu0 %847
    %v850 = vmul.f32 %v832, %v848
    %v851 = vpack.c.bf16 %v850, %v850
    %v852 = vld [vmem:[#allocation2 + $0x70] sm:$0xff]
    %v853 = vld [vmem:[#allocation2 + $0x78] sm:$0xff]
    %v855 = vsel %vm321, %v851, 0
    %857 = vmatpush.bf16.msra.mxu0 0
    %858 = vmatpush.bf16.msra.mxu0 0
    %859 = vmatpush.bf16.msra.mxu0 0
    %860 = vmatpush.bf16.msra.mxu0 0
    %861 = vmatpush.bf16.msra.mxu0 %v311
    %862 = vmatpush.bf16.msra.mxu0 %v309
    %863 = vmatpush.bf16.msra.mxu0 %v307
    %864 = vmatpush.bf16.msra.mxu0 %v305
    %865 = vmatmul.bf16.gmra.mxu0 %v855
    %v866 = vpop.f32.mrf.mxu0
    %v867 = vadd.f32 %v852, %v866
    %v868 = vpop.f32.mrf.mxu0
    %869 = vdwg.mxu0
    %870 = vmatpush.bf16.msra.mxu0 0
    %871 = vmatpush.bf16.msra.mxu0 0
    %872 = vmatpush.bf16.msra.mxu0 0
    %873 = vmatpush.bf16.msra.mxu0 0
    %874 = vmatpush.bf16.msra.mxu0 %v312
    %875 = vmatpush.bf16.msra.mxu0 %v310
    %876 = vmatpush.bf16.msra.mxu0 %v308
    %877 = vmatpush.bf16.msra.mxu0 %v306
    %878 = vmatmul.bf16.gmra.mxu0 %v855
    %v879 = vpop.f32.mrf.mxu0
    %v880 = vadd.f32 %v853, %v879
    %v881 = vpop.f32.mrf.mxu0
    %882 = vdwg.mxu0
    %v883 = vxor.u32 %v867, 2147483648
    %v884 = vxor.u32 %v880, 2147483648
    %v885 = vmul.f32 %v883, 1.442695
    %v886 = vpow.pop %v885
    %v887 = vmul.f32 %v884, 1.442695
    %v888 = vpow.pop %v887
    %v889 = vadd.f32 %v886, 1.0
    %v890 = vadd.f32 %v888, 1.0
    %v891 = vrcp.pop %v889
    %v892 = vmul.f32 %v889, %v891
    %v893 = vsub.f32 1.0, %v892
    %v894 = vmul.f32 %v891, %v893
    %v895 = vadd.f32 %v891, %v894
    %vm896 = vweird.f32 %v889
    %vm897 = vweird.f32 %v891
    %vm898 = vmor %vm896, %vm897
    %v899 = vsel %vm898, %v891, %v895
    %v900 = vand.u32 2147483647, %v889
    %vm901 = vcmp.eq.f32.partialorder %v900, 8.507059e+37
    %v902 = vand.u32 %v889, 2147483648
    %v903 = vor.u32 1.1754944e-38, %v902
    %v904 = vsel %vm901, %v903, %v899
    %v905 = vmul.f32 1.0, %v904
    %v906 = vrcp.pop %v890
    %v907 = vmul.f32 %v890, %v906
    %v908 = vsub.f32 1.0, %v907
    %v909 = vmul.f32 %v906, %v908
    %v910 = vadd.f32 %v906, %v909
    %vm911 = vweird.f32 %v890
    %vm912 = vweird.f32 %v906
    %vm913 = vmor %vm911, %vm912
    %v914 = vsel %vm913, %v906, %v910
    %v915 = vand.u32 2147483647, %v890
    %vm916 = vcmp.eq.f32.partialorder %v915, 8.507059e+37
    %v917 = vand.u32 %v890, 2147483648
    %v918 = vor.u32 1.1754944e-38, %v917
    %v919 = vsel %vm916, %v918, %v914
    %v920 = vmul.f32 1.0, %v919
    %v921 = vtanh.pop %v880
    %v922 = vmul.f32 %v905, %v844
    %924 = vrot.lane.b32.xlu0 %v921, 64
    %v925 = vpop.permute.xlu0 %924
    %v927 = vmul.f32 %v905, %v925
    %929 = vrot.lane.b32.xlu0 %v927, 64
    %v930 = vpop.permute.xlu0 %929
    %v932 = vadd.f32 %v922, %v930
    %v933 = vtanh.pop %v932
    %935 = vrot.lane.b32.xlu0 %v933, 64
    %v936 = vpop.permute.xlu0 %935
    %v938 = vmul.f32 %v920, %v936
    %v939 = vpack.c.bf16 %v938, %v938
    %v940 = vld [vmem:[#allocation2 + $0x80] sm:$0xff]
    %v941 = vld [vmem:[#allocation2 + $0x88] sm:$0xff]
    %v943 = vsel %vm321, %v939, 0
    %945 = vmatpush.bf16.msra.mxu0 0
    %946 = vmatpush.bf16.msra.mxu0 0
    %947 = vmatpush.bf16.msra.mxu0 0
    %948 = vmatpush.bf16.msra.mxu0 0
    %949 = vmatpush.bf16.msra.mxu0 %v311
    %950 = vmatpush.bf16.msra.mxu0 %v309
    %951 = vmatpush.bf16.msra.mxu0 %v307
    %952 = vmatpush.bf16.msra.mxu0 %v305
    %953 = vmatmul.bf16.gmra.mxu0 %v943
    %v954 = vpop.f32.mrf.mxu0
    %v955 = vadd.f32 %v940, %v954
    %v956 = vpop.f32.mrf.mxu0
    %957 = vdwg.mxu0
    %958 = vmatpush.bf16.msra.mxu0 0
    %959 = vmatpush.bf16.msra.mxu0 0
    %960 = vmatpush.bf16.msra.mxu0 0
    %961 = vmatpush.bf16.msra.mxu0 0
    %962 = vmatpush.bf16.msra.mxu0 %v312
    %963 = vmatpush.bf16.msra.mxu0 %v310
    %964 = vmatpush.bf16.msra.mxu0 %v308
    %965 = vmatpush.bf16.msra.mxu0 %v306
    %966 = vmatmul.bf16.gmra.mxu0 %v943
    %v967 = vpop.f32.mrf.mxu0
    %v968 = vadd.f32 %v941, %v967
    %v969 = vpop.f32.mrf.mxu0
    %970 = vdwg.mxu0
    %v971 = vxor.u32 %v955, 2147483648
    %v972 = vxor.u32 %v968, 2147483648
    %v973 = vmul.f32 %v971, 1.442695
    %v974 = vpow.pop %v973
    %v975 = vmul.f32 %v972, 1.442695
    %v976 = vpow.pop %v975
    %v977 = vadd.f32 %v974, 1.0
    %v978 = vadd.f32 %v976, 1.0
    %v979 = vrcp.pop %v977
    %v980 = vmul.f32 %v977, %v979
    %v981 = vsub.f32 1.0, %v980
    %v982 = vmul.f32 %v979, %v981
    %v983 = vadd.f32 %v979, %v982
    %vm984 = vweird.f32 %v977
    %vm985 = vweird.f32 %v979
    %vm986 = vmor %vm984, %vm985
    %v987 = vsel %vm986, %v979, %v983
    %v988 = vand.u32 2147483647, %v977
    %vm989 = vcmp.eq.f32.partialorder %v988, 8.507059e+37
    %v990 = vand.u32 %v977, 2147483648
    %v991 = vor.u32 1.1754944e-38, %v990
    %v992 = vsel %vm989, %v991, %v987
    %v993 = vmul.f32 1.0, %v992
    %v994 = vrcp.pop %v978
    %v995 = vmul.f32 %v978, %v994
    %v996 = vsub.f32 1.0, %v995
    %v997 = vmul.f32 %v994, %v996
    %v998 = vadd.f32 %v994, %v997
    %vm999 = vweird.f32 %v978
    %vm1000 = vweird.f32 %v994
    %vm1001 = vmor %vm999, %vm1000
    %v1002 = vsel %vm1001, %v994, %v998
    %v1003 = vand.u32 2147483647, %v978
    %vm1004 = vcmp.eq.f32.partialorder %v1003, 8.507059e+37
    %v1005 = vand.u32 %v978, 2147483648
    %v1006 = vor.u32 1.1754944e-38, %v1005
    %v1007 = vsel %vm1004, %v1006, %v1002
    %v1008 = vmul.f32 1.0, %v1007
    %v1009 = vtanh.pop %v968
    %v1010 = vmul.f32 %v993, %v932
    %1012 = vrot.lane.b32.xlu0 %v1009, 64
    %v1013 = vpop.permute.xlu0 %1012
    %v1015 = vmul.f32 %v993, %v1013
    %1017 = vrot.lane.b32.xlu0 %v1015, 64
    %v1018 = vpop.permute.xlu0 %1017
    %v1020 = vadd.f32 %v1010, %v1018
    %v1021 = vtanh.pop %v1020
    %1023 = vrot.lane.b32.xlu0 %v1021, 64
    %v1024 = vpop.permute.xlu0 %1023
    %v1026 = vmul.f32 %v1008, %v1024
    %v1027 = vpack.c.bf16 %v1026, %v1026
    %v1028 = vld [vmem:[%s4] sm:$0xf]
    %v1029 = vld [vmem:[%s4 + $0x4] sm:$0xf]
    %v1030 = vld [vmem:[%s4 + $0x8] sm:$0xf]
    %v1031 = vld [vmem:[%s4 + $0xc] sm:$0xf]
    %v1032 = vld [vmem:[%s5] sm:$0x1]
    %v1034 = vperm.slane %v1032, 0
    %1037 = vrot.lane.b32.xlu0 %v1027, 96
    %v1038 = vpop.permute.xlu0 %1037
    %v1043 = vunpack.c.l.b16 %v1028
    %v1044 = vunpack.c.l.b16 %v1029
    %v1045 = vunpack.c.l.b16 %v1030
    %v1046 = vunpack.c.l.b16 %v1031
    %v1047 = vpack.c.b16 %v1044, %v1043
    %v1048 = vpack.c.b16 %v1046, %v1045
    %v1052 = vsel %vm103, %v1038, 0
    %1054 = vmatpush.bf16.msra.mxu0 0
    %1055 = vmatpush.bf16.msra.mxu0 0
    %1056 = vmatpush.bf16.msra.mxu0 0
    %1057 = vmatpush.bf16.msra.mxu0 0
    %1058 = vmatpush.bf16.msra.mxu0 0
    %1059 = vmatpush.bf16.msra.mxu0 0
    %1060 = vmatpush.bf16.msra.mxu0 %v1048
    %1061 = vmatpush.bf16.msra.mxu0 %v1047
    %1062 = vmatmul.bf16.gmra.mxu0 %v1052
    %v1063 = vpop.f32.mrf.mxu0
    %v1064 = vadd.f32 %v1034, %v1063
    %v1065 = vpop.f32.mrf.mxu0
    %1066 = vdwg.mxu0
    %1067 = vst.msk [vmem:[#allocation6] sm:$0xff] %vm103, %v1064
    // Predicated region
    $region30: #{tpu_custom_call.1} parent=1 // pred_check
      _
    $region31: #{tpu_custom_call.1} parent=1 // pred_check_branch
      %1069 = sbr.rel (0) target = $region33
    $region32: #{tpu_custom_call.1} parent=1 // pred_region
      %1071 = vsyncadd [#allocation5], 0
      %s1073 = sshll.u32 [#allocation6], 4
      %s1074 = int_to_ptr.vmem [resolvable:$true] %s1073
      %s1075 = sshll.u32 %s6, 4
      %s1076 = int_to_ptr.hbm [resolvable:$true] %s1075
      %1078 = dma.vmem_to_hbm [thread:$0]  %s1074, 128, %s1076, [#allocation5]
    $region33: #{tpu_custom_call.1} parent=1 // pred_fallthru
      _
    // Predicated region
    $region34: #{tpu_custom_call.1} parent=1 // pred_check
      _
    $region35: #{tpu_custom_call.1} parent=1 // pred_check_branch
      %1080 = sbr.rel (0) target = $region37
    $region36: #{tpu_custom_call.1} parent=1 // pred_region
      %1082 = dma.done [#allocation5], 128
    $region37: #{tpu_custom_call.1} parent=1 // pred_fallthru
      _
    %1083 = vsyncpa [#allocation4], 1
    %1084 = vsyncpa [#allocation5], 1

</llo_original>
